<compile_context>
chip_gen: v7x
topology: tpu7x:2x2x1
jax: 0.10.0
libtpu: 0.0.40
codegen_flags: <defaults>
</compile_context>

<pallas_src>
import jax
import jax.numpy as jnp
from jax import lax
from jax.experimental import pallas as pl
from jax.experimental.pallas import tpu as pltpu

IN_F, HID, OUT_F = 45, 64, 6
TB_MAX = 4096  # max batch rows per grid step (VMEM- and megacore-friendly)

# Contract dim 1 of lhs with dim 1 of rhs:  (64, 45) x (TB, 45) -> (64, TB).
_NT_DIMS = (((1,), (1,)), ((), ()))


def qnet_kernel(x_ref, w1_ref, b1_ref, w2_ref, b2_ref, w3_ref, b3_ref, o_ref):
    # x_ref: (TB, 45) f32 tile; cast to bf16 in-kernel (hidden under MXU work).
    x_bf = x_ref[...].astype(jnp.bfloat16)

    # Layer 1: batch-on-lanes NT matmul -> (64, TB), f32 accumulation.
    h1 = lax.dot_general(w1_ref[...], x_bf, _NT_DIMS,
                         preferred_element_type=jnp.float32) + b1_ref[...]
    h1 = jnp.maximum(h1, 0.0)

    # Layer 2: (64, 64) @ (64, TB) -> (64, TB).
    h2 = jnp.dot(w2_ref[...], h1.astype(jnp.bfloat16),
                 preferred_element_type=jnp.float32) + b2_ref[...]
    h2 = jnp.maximum(h2, 0.0)

    # Layer 3: (6, 64) @ (64, TB) -> (6, TB)   (lane-dense output block).
    o_ref[...] = jnp.dot(w3_ref[...], h2.astype(jnp.bfloat16),
                         preferred_element_type=jnp.float32) + b3_ref[...]


def _round_up(n, m):
    return (n + m - 1) // m * m


def _pick_tile(batch, tb_max):
    """Return (tile_rows, num_tiles) for the batch-tiled grid."""
    small = min(512, tb_max)
    if batch <= small:
        return batch, 1                         # single full-extent block
    n_tiles = max(pl.cdiv(batch, tb_max), 2)    # >= 2 steps (v7x megacore)
    tb = _round_up(pl.cdiv(batch, n_tiles), 128)  # lane-divisible out block
    return tb, pl.cdiv(batch, tb)


def q_net_forward(x, params, tb_max=TB_MAX):
    """x: (B, ...) flattened to (B, 45). Returns (B, 6) float32."""
    B = x.shape[0]
    x = x.reshape(B, IN_F)
    w1, b1, w2, b2, w3, b3 = params  # PyTorch layout: w (out, in), b (out,)

    # Tiny parameter prep only (no full-array passes over x).
    w1b, w2b, w3b = (w.astype(jnp.bfloat16) for w in (w1, w2, w3))
    b1c, b2c, b3c = (b.reshape(-1, 1).astype(jnp.float32) for b in (b1, b2, b3))

    TB, n_tiles = _pick_tile(B, tb_max)

    def resident(arr):  # weights/biases: same block every grid step
        return pl.BlockSpec(arr.shape, lambda i: (0, 0))

    flops = 2 * B * (IN_F * HID + HID * HID + HID * OUT_F)
    bytes_accessed = (B * IN_F * 4 + B * OUT_F * 4
                      + (w1b.size + w2b.size + w3b.size) * 2
                      + (HID + HID + OUT_F) * 4)

    out_t = pl.pallas_call(
        qnet_kernel,
        out_shape=jax.ShapeDtypeStruct((OUT_F, B), jnp.float32),
        grid=(n_tiles,),
        in_specs=[
            pl.BlockSpec((TB, IN_F), lambda i: (i, 0)),   # x: tiled over batch
            resident(w1b), resident(b1c),
            resident(w2b), resident(b2c),
            resident(w3b), resident(b3c),
        ],
        out_specs=pl.BlockSpec((OUT_F, TB), lambda i: (0, i)),  # lane-dense
        compiler_params=pltpu.CompilerParams(
            dimension_semantics=("parallel",),            # megacore on v7x
        ),
        cost_estimate=pl.CostEstimate(flops=flops, transcendentals=0,
                                      bytes_accessed=bytes_accessed),
    )(x, w1b, b1c, w2b, b2c, w3b, b3c)

    # Tiny (6, B) -> (B, 6) transpose to restore the module's output layout.
    return out_t.T


def init_params(key):
    """Deterministic init matching nn.Linear (PyTorch layout: w (out, in))."""
    def linear(key, fan_in, fan_out):
        kw, kb = jax.random.split(key)
        bound = 1.0 / jnp.sqrt(jnp.float32(fan_in))
        w = jax.random.uniform(kw, (fan_out, fan_in), jnp.float32, -bound, bound)
        b = jax.random.uniform(kb, (fan_out,), jnp.float32, -bound, bound)
        return w, b

    k1, k2, k3 = jax.random.split(key, 3)
    w1, b1 = linear(k1, IN_F, HID)
    w2, b2 = linear(k2, HID, HID)
    w3, b3 = linear(k3, HID, OUT_F)
    return (w1, b1, w2, b2, w3, b3)


def reference_forward(x, params):
    """Pure-JAX f32 reference of the PyTorch forward."""
    w1, b1, w2, b2, w3, b3 = params
    x = x.reshape(x.shape[0], IN_F).astype(jnp.float32)
    h1 = jnp.maximum(x @ w1.T + b1, 0.0)
    h2 = jnp.maximum(h1 @ w2.T + b2, 0.0)
    return h2 @ w3.T + b3


if __name__ == "__main__":
    key = jax.random.PRNGKey(0)
    kx, kx2, kp = jax.random.split(key, 3)
    params = init_params(kp)

    # Small primary check (B=2, single full-extent block).
    B = 2
    x = jax.random.normal(kx, (B, IN_F), jnp.float32)
    out = jax.block_until_ready(q_net_forward(x, params))
    ref = reference_forward(x, params)
    assert out.shape == (B, OUT_F)
    # bf16 MXU operands with f32 accumulation -> loosened tolerance vs f32 ref.
    assert jnp.allclose(out, ref, atol=5e-2, rtol=5e-2), "mismatch vs reference (B=2)"

    # Multi-tile path with a partial (masked) last block: B=300, TB=128 -> grid=3.
    B2 = 300
    x2 = jax.random.normal(kx2, (B2, IN_F), jnp.float32)
    out2 = jax.block_until_ready(q_net_forward(x2, params, tb_max=128))
    ref2 = reference_forward(x2, params)
    assert out2.shape == (B2, OUT_F)
    assert jnp.allclose(out2, ref2, atol=5e-2, rtol=5e-2), "mismatch vs reference (B=300)"

    print("KERNEL_OK")
</pallas_src>

<mosaic_0001>
module attributes {stable_mosaic.version = 11 : i64} {
  func.func @qnet_kernel(%arg0: i32, %arg1: memref<2x45xf32, #tpu.memory_space<vmem>>, %arg2: memref<64x45xbf16, #tpu.memory_space<vmem>>, %arg3: memref<64x1xf32, #tpu.memory_space<vmem>>, %arg4: memref<64x64xbf16, #tpu.memory_space<vmem>>, %arg5: memref<64x1xf32, #tpu.memory_space<vmem>>, %arg6: memref<6x64xbf16, #tpu.memory_space<vmem>>, %arg7: memref<6x1xf32, #tpu.memory_space<vmem>>, %arg8: memref<6x2xf32, #tpu.memory_space<vmem>>) attributes {dimension_semantics = [#tpu.dimension_semantics<parallel>], iteration_bounds = array<i64: 1>, scalar_prefetch = 0 : i64, scratch_operands = 0 : i64, tpu.core_type = #tpu.core_type<tc>, window_params = [{transform_indices = @transform_0, window_bounds = array<i64: 2, 45>}, {pipeline_mode = #tpu.pipeline_mode<synchronous>, transform_indices = @transform_1, window_bounds = array<i64: 64, 45>}, {pipeline_mode = #tpu.pipeline_mode<synchronous>, transform_indices = @transform_2, window_bounds = array<i64: 64, 1>}, {pipeline_mode = #tpu.pipeline_mode<synchronous>, transform_indices = @transform_3, window_bounds = array<i64: 64, 64>}, {pipeline_mode = #tpu.pipeline_mode<synchronous>, transform_indices = @transform_4, window_bounds = array<i64: 64, 1>}, {pipeline_mode = #tpu.pipeline_mode<synchronous>, transform_indices = @transform_5, window_bounds = array<i64: 6, 64>}, {pipeline_mode = #tpu.pipeline_mode<synchronous>, transform_indices = @transform_6, window_bounds = array<i64: 6, 1>}, {transform_indices = @transform_7, window_bounds = array<i64: 6, 2>}]} {
    %c0 = arith.constant 0 : index
    %c0_0 = arith.constant 0 : index
    %0 = vector.load %arg1[%c0, %c0_0] : memref<2x45xf32, #tpu.memory_space<vmem>>, vector<2x45xf32>
    %1 = arith.truncf %0 : vector<2x45xf32> to vector<2x45xbf16>
    %c0_1 = arith.constant 0 : index
    %c0_2 = arith.constant 0 : index
    %2 = vector.load %arg2[%c0_1, %c0_2] : memref<64x45xbf16, #tpu.memory_space<vmem>>, vector<64x45xbf16>
    %cst = arith.constant dense<0.000000e+00> : vector<64x2xf32>
    %3 = tpu.matmul %2, %1, %cst {dimension_numbers = #tpu.dot_dimension_numbers<[1], [1], [0], [0], [0, 0, 1, 0], [], []>} : vector<64x45xbf16>, vector<2x45xbf16>, vector<64x2xf32> -> vector<64x2xf32>
    %c0_3 = arith.constant 0 : index
    %c0_4 = arith.constant 0 : index
    %4 = vector.load %arg3[%c0_3, %c0_4] : memref<64x1xf32, #tpu.memory_space<vmem>>, vector<64x1xf32>
    %5 = vector.broadcast %4 : vector<64x1xf32> to vector<64x2xf32>
    %6 = arith.addf %3, %5 : vector<64x2xf32>
    %cst_5 = arith.constant 0.000000e+00 : f32
    %7 = vector.broadcast %cst_5 : f32 to vector<64x2xf32>
    %8 = arith.maximumf %6, %7 : vector<64x2xf32>
    %c0_6 = arith.constant 0 : index
    %c0_7 = arith.constant 0 : index
    %9 = vector.load %arg4[%c0_6, %c0_7] : memref<64x64xbf16, #tpu.memory_space<vmem>>, vector<64x64xbf16>
    %10 = arith.truncf %8 : vector<64x2xf32> to vector<64x2xbf16>
    %cst_8 = arith.constant dense<0.000000e+00> : vector<64x2xf32>
    %11 = tpu.matmul %9, %10, %cst_8 {dimension_numbers = #tpu.dot_dimension_numbers<[1], [0], [0], [1], [0, 0, 1, 1], [], []>} : vector<64x64xbf16>, vector<64x2xbf16>, vector<64x2xf32> -> vector<64x2xf32>
    %c0_9 = arith.constant 0 : index
    %c0_10 = arith.constant 0 : index
    %12 = vector.load %arg5[%c0_9, %c0_10] : memref<64x1xf32, #tpu.memory_space<vmem>>, vector<64x1xf32>
    %13 = vector.broadcast %12 : vector<64x1xf32> to vector<64x2xf32>
    %14 = arith.addf %11, %13 : vector<64x2xf32>
    %cst_11 = arith.constant 0.000000e+00 : f32
    %15 = vector.broadcast %cst_11 : f32 to vector<64x2xf32>
    %16 = arith.maximumf %14, %15 : vector<64x2xf32>
    %c0_12 = arith.constant 0 : index
    %c0_13 = arith.constant 0 : index
    %17 = vector.load %arg6[%c0_12, %c0_13] : memref<6x64xbf16, #tpu.memory_space<vmem>>, vector<6x64xbf16>
    %18 = arith.truncf %16 : vector<64x2xf32> to vector<64x2xbf16>
    %cst_14 = arith.constant dense<0.000000e+00> : vector<6x2xf32>
    %19 = tpu.matmul %17, %18, %cst_14 {dimension_numbers = #tpu.dot_dimension_numbers<[1], [0], [0], [1], [0, 0, 1, 1], [], []>} : vector<6x64xbf16>, vector<64x2xbf16>, vector<6x2xf32> -> vector<6x2xf32>
    %c0_15 = arith.constant 0 : index
    %c0_16 = arith.constant 0 : index
    %20 = vector.load %arg7[%c0_15, %c0_16] : memref<6x1xf32, #tpu.memory_space<vmem>>, vector<6x1xf32>
    %21 = vector.broadcast %20 : vector<6x1xf32> to vector<6x2xf32>
    %22 = arith.addf %19, %21 : vector<6x2xf32>
    %c0_17 = arith.constant 0 : index
    %c0_18 = arith.constant 0 : index
    %23 = vector.load %arg8[%c0_17, %c0_18] : memref<6x2xf32, #tpu.memory_space<vmem>>, vector<6x2xf32>
    tpu.vector_store %arg8[%c0_17, %c0_18], %22 {strides = array<i32>} : memref<6x2xf32, #tpu.memory_space<vmem>>, vector<6x2xf32>,
    return
  }
  func.func @transform_0(%arg0: i32) -> (i32, i32) {
    %c0_i32 = arith.constant 0 : i32
    %c0_i32_0 = arith.constant 0 : i32
    return %arg0, %c0_i32 : i32, i32
  }
  func.func @transform_1(%arg0: i32) -> (i32, i32) {
    %c0_i32 = arith.constant 0 : i32
    %c0_i32_0 = arith.constant 0 : i32
    %c0_i32_1 = arith.constant 0 : i32
    return %c0_i32, %c0_i32_0 : i32, i32
  }
  func.func @transform_2(%arg0: i32) -> (i32, i32) {
    %c0_i32 = arith.constant 0 : i32
    %c0_i32_0 = arith.constant 0 : i32
    %c0_i32_1 = arith.constant 0 : i32
    return %c0_i32, %c0_i32_0 : i32, i32
  }
  func.func @transform_3(%arg0: i32) -> (i32, i32) {
    %c0_i32 = arith.constant 0 : i32
    %c0_i32_0 = arith.constant 0 : i32
    %c0_i32_1 = arith.constant 0 : i32
    return %c0_i32, %c0_i32_0 : i32, i32
  }
  func.func @transform_4(%arg0: i32) -> (i32, i32) {
    %c0_i32 = arith.constant 0 : i32
    %c0_i32_0 = arith.constant 0 : i32
    %c0_i32_1 = arith.constant 0 : i32
    return %c0_i32, %c0_i32_0 : i32, i32
  }
  func.func @transform_5(%arg0: i32) -> (i32, i32) {
    %c0_i32 = arith.constant 0 : i32
    %c0_i32_0 = arith.constant 0 : i32
    %c0_i32_1 = arith.constant 0 : i32
    return %c0_i32, %c0_i32_0 : i32, i32
  }
  func.func @transform_6(%arg0: i32) -> (i32, i32) {
    %c0_i32 = arith.constant 0 : i32
    %c0_i32_0 = arith.constant 0 : i32
    %c0_i32_1 = arith.constant 0 : i32
    return %c0_i32, %c0_i32_0 : i32, i32
  }
  func.func @transform_7(%arg0: i32) -> (i32, i32) {
    %c0_i32 = arith.constant 0 : i32
    %c0_i32_0 = arith.constant 0 : i32
    return %c0_i32, %arg0 : i32, i32
  }
}

</mosaic_0001>

<llo_original>
// kernel: tpu_custom_call.1
$region0: #{tpu_custom_call.1}
  #allocation0 [shape = 'u32[]', space=smem, size = 0x4, offset = 0x4, fixed_abs, tag = 'smem constant byte address 0x4 - core index']
  #allocation1 [shape = 'u32[144,128]{1,0:T(1,128)}', space=vmem, size = 0x12000, scoped, tag = 'internal scratch']
  %s0 = inlined_call_operand.vmem [shape: f32[2,45], index: 0, kind: input, shape index: {}]
  %s1 = inlined_call_operand.vmem [shape: bf16[64,45], index: 1, kind: input, shape index: {}]
  %s2 = inlined_call_operand.vmem [shape: f32[64,1], index: 2, kind: input, shape index: {}]
  %s3 = inlined_call_operand.vmem [shape: bf16[64,64], index: 3, kind: input, shape index: {}]
  %s4 = inlined_call_operand.vmem [shape: f32[64,1], index: 4, kind: input, shape index: {}]
  %s5 = inlined_call_operand.vmem [shape: bf16[6,64], index: 5, kind: input, shape index: {}]
  %s6 = inlined_call_operand.vmem [shape: f32[6,1], index: 6, kind: input, shape index: {}]
  %s7 = inlined_call_operand.vmem [shape: f32[6,2], index: 7, kind: output, shape index: {}]
  %s8 = sld [smem:[#allocation0]]
  $region38: #{tpu_custom_call.1} parent=0
    _
  %s10 = ssub.s32 1, %s8
  %s11 = scalar_select 0, %s10, %s8
  // Predicated region
  $region2: #{tpu_custom_call.1} parent=0 // pred_check
    _
  $region3: #{tpu_custom_call.1} parent=0 // pred_check_branch
    %13 = sbr.rel (0) target = $region5
  $region4: #{tpu_custom_call.1} parent=0 // pred_region
    _
  $region5: #{tpu_custom_call.1} parent=0 // pred_fallthru
    _
  // Predicated region
  $region6: #{tpu_custom_call.1} parent=0 // pred_check
    _
  $region7: #{tpu_custom_call.1} parent=0 // pred_check_branch
    %15 = sbr.rel (0) target = $region9
  $region8: #{tpu_custom_call.1} parent=0 // pred_region
    _
  $region9: #{tpu_custom_call.1} parent=0 // pred_fallthru
    _
  // Predicated region
  $region10: #{tpu_custom_call.1} parent=0 // pred_check
    _
  $region11: #{tpu_custom_call.1} parent=0 // pred_check_branch
    %17 = sbr.rel (0) target = $region13
  $region12: #{tpu_custom_call.1} parent=0 // pred_region
    _
  $region13: #{tpu_custom_call.1} parent=0 // pred_fallthru
    _
  // Predicated region
  $region14: #{tpu_custom_call.1} parent=0 // pred_check
    _
  $region15: #{tpu_custom_call.1} parent=0 // pred_check_branch
    %19 = sbr.rel (0) target = $region17
  $region16: #{tpu_custom_call.1} parent=0 // pred_region
    _
  $region17: #{tpu_custom_call.1} parent=0 // pred_fallthru
    _
  // Predicated region
  $region18: #{tpu_custom_call.1} parent=0 // pred_check
    _
  $region19: #{tpu_custom_call.1} parent=0 // pred_check_branch
    %21 = sbr.rel (0) target = $region21
  $region20: #{tpu_custom_call.1} parent=0 // pred_region
    _
  $region21: #{tpu_custom_call.1} parent=0 // pred_fallthru
    _
  // Predicated region
  $region22: #{tpu_custom_call.1} parent=0 // pred_check
    _
  $region23: #{tpu_custom_call.1} parent=0 // pred_check_branch
    %23 = sbr.rel (0) target = $region25
  $region24: #{tpu_custom_call.1} parent=0 // pred_region
    _
  $region25: #{tpu_custom_call.1} parent=0 // pred_fallthru
    _
  // Predicated region
  $region26: #{tpu_custom_call.1} parent=0 // pred_check
    _
  $region27: #{tpu_custom_call.1} parent=0 // pred_check_branch
    %25 = sbr.rel (0) target = $region29
  $region28: #{tpu_custom_call.1} parent=0 // pred_region
    _
  $region29: #{tpu_custom_call.1} parent=0 // pred_fallthru
    _
  %v27 = vld [vmem:[%s0] sm:$0x3]
  %v28 = vpack.c.bf16 %v27, %v27
  %v29 = vld [vmem:[%s1] sm:$0xf]
  %v30 = vld [vmem:[%s1 + $0x4] sm:$0xf]
  %v31 = vld [vmem:[%s1 + $0x8] sm:$0xf]
  %v32 = vld [vmem:[%s1 + $0xc] sm:$0xf]
  %v33 = vld [vmem:[%s1 + $0x10] sm:$0xf]
  %v34 = vld [vmem:[%s1 + $0x14] sm:$0xf]
  %v35 = vld [vmem:[%s1 + $0x18] sm:$0xf]
  %v36 = vld [vmem:[%s1 + $0x1c] sm:$0xf]
  %v37 = vld [vmem:[%s2] sm:$0xff]
  %v38 = vld [vmem:[%s2 + $0x8] sm:$0xff]
  %v39 = vld [vmem:[%s2 + $0x10] sm:$0xff]
  %v40 = vld [vmem:[%s2 + $0x18] sm:$0xff]
  %v41 = vld [vmem:[%s2 + $0x20] sm:$0xff]
  %v42 = vld [vmem:[%s2 + $0x28] sm:$0xff]
  %v43 = vld [vmem:[%s2 + $0x30] sm:$0xff]
  %v44 = vld [vmem:[%s2 + $0x38] sm:$0xff]
  %46 = vset.pattern.permute.xlu0 0
  %47 = vperm.xlu0 %46, %v37
  %v48 = vpop.permute.xlu0 %47
  %51 = vset.pattern.permute.xlu0 0
  %52 = vperm.xlu0 %51, %v38
  %v53 = vpop.permute.xlu0 %52
  %56 = vset.pattern.permute.xlu0 0
  %57 = vperm.xlu0 %56, %v39
  %v58 = vpop.permute.xlu0 %57
  %61 = vset.pattern.permute.xlu0 0
  %62 = vperm.xlu0 %61, %v40
  %v63 = vpop.permute.xlu0 %62
  %66 = vset.pattern.permute.xlu0 0
  %67 = vperm.xlu0 %66, %v41
  %v68 = vpop.permute.xlu0 %67
  %71 = vset.pattern.permute.xlu0 0
  %72 = vperm.xlu0 %71, %v42
  %v73 = vpop.permute.xlu0 %72
  %76 = vset.pattern.permute.xlu0 0
  %77 = vperm.xlu0 %76, %v43
  %v78 = vpop.permute.xlu0 %77
  %81 = vset.pattern.permute.xlu0 0
  %82 = vperm.xlu0 %81, %v44
  %v83 = vpop.permute.xlu0 %82
  %v93 = vunpack.c.l.b16 %v29
  %v94 = vunpack.c.l.b16 %v30
  %v95 = vunpack.c.l.b16 %v31
  %v96 = vunpack.c.l.b16 %v32
  %v97 = vunpack.c.l.b16 %v33
  %v98 = vunpack.c.l.b16 %v34
  %v99 = vunpack.c.l.b16 %v35
  %v100 = vunpack.c.l.b16 %v36
  %v101 = vpack.c.b16 %v94, %v93
  %v102 = vpack.c.b16 %v96, %v95
  %v103 = vpack.c.b16 %v98, %v97
  %v104 = vpack.c.b16 %v100, %v99
  %vm105 = vcmask 367616
  %v107 = vsel %vm105, %v101, 0
  %v110 = vsel %vm105, %v102, 0
  %v113 = vsel %vm105, %v103, 0
  %v116 = vsel %vm105, %v104, 0
  %v119 = vsel %vm105, %v28, 0
  %121 = vmatprep.subr.bf16.mxu0 0
  %122 = vmatpush1.bf16.xpose.msra.mxu0 %v119
  %123 = vmatprep.subr.bf16.mxu0 0
  %124 = vmatpush1.bf16.xpose.msra.mxu0 0
  %125 = vmatprep.subr.bf16.mxu0 0
  %126 = vmatpush1.bf16.xpose.msra.mxu0 0
  %127 = vmatprep.subr.bf16.mxu0 0
  %128 = vmatpush1.bf16.xpose.msra.mxu0 0
  %129 = vmatprep.subr.bf16.mxu0 0
  %130 = vmatpush1.bf16.xpose.msra.mxu0 0
  %131 = vmatprep.subr.bf16.mxu0 0
  %132 = vmatpush1.bf16.xpose.msra.mxu0 0
  %133 = vmatprep.subr.bf16.mxu0 0
  %134 = vmatpush1.bf16.xpose.msra.mxu0 0
  %135 = vmatprep.subr.bf16.mxu0 0
  %136 = vmatpush1.bf16.xpose.msra.mxu0 0
  %137 = vmatprep.subr.bf16.mxu0 0
  %138 = vmatpush1.bf16.xpose.msra.mxu0 0
  %139 = vmatprep.subr.bf16.mxu0 0
  %140 = vmatpush1.bf16.xpose.msra.mxu0 0
  %141 = vmatprep.subr.bf16.mxu0 0
  %142 = vmatpush1.bf16.xpose.msra.mxu0 0
  %143 = vmatprep.subr.bf16.mxu0 0
  %144 = vmatpush1.bf16.xpose.msra.mxu0 0
  %145 = vmatprep.subr.bf16.mxu0 0
  %146 = vmatpush1.bf16.xpose.msra.mxu0 0
  %147 = vmatprep.subr.bf16.mxu0 0
  %148 = vmatpush1.bf16.xpose.msra.mxu0 0
  %149 = vmatprep.subr.bf16.mxu0 0
  %150 = vmatpush1.bf16.xpose.msra.mxu0 0
  %151 = vmatprep.subr.bf16.mxu0 0
  %152 = vmatpush1.bf16.xpose.msra.mxu0 0
  %153 = vmatprep.mubr.bf16.mxu0 0
  %154 = vmatmul.mubr.bf16.gmra.mrb[0].mxu0 %v107
  %v155 = vpop.f32.mrb[0].mxu0
  %v156 = vadd.f32 %v48, %v155
  %v157 = vpop.f32.mrb[0].mxu0
  %v158 = vpop.f32.mrb[0].mxu0
  %v159 = vadd.f32 %v53, %v158
  %v160 = vpop.f32.mrb[0].mxu0
  %161 = vmatprep.mubr.bf16.mxu0 0
  %162 = vmatmul.mubr.bf16.gmra.mrb[0].mxu0 %v110
  %v163 = vpop.f32.mrb[0].mxu0
  %v164 = vadd.f32 %v58, %v163
  %v165 = vpop.f32.mrb[0].mxu0
  %v166 = vpop.f32.mrb[0].mxu0
  %v167 = vadd.f32 %v63, %v166
  %v168 = vpop.f32.mrb[0].mxu0
  %169 = vmatprep.mubr.bf16.mxu0 0
  %170 = vmatmul.mubr.bf16.gmra.mrb[0].mxu0 %v113
  %v171 = vpop.f32.mrb[0].mxu0
  %v172 = vadd.f32 %v68, %v171
  %v173 = vpop.f32.mrb[0].mxu0
  %v174 = vpop.f32.mrb[0].mxu0
  %v175 = vadd.f32 %v73, %v174
  %v176 = vpop.f32.mrb[0].mxu0
  %177 = vmatprep.mubr.bf16.mxu0 0
  %178 = vmatmul.mubr.bf16.gmra.mrb[0].mxu0 %v116
  %v179 = vpop.f32.mrb[0].mxu0
  %v180 = vadd.f32 %v78, %v179
  %v181 = vpop.f32.mrb[0].mxu0
  %v182 = vpop.f32.mrb[0].mxu0
  %v183 = vadd.f32 %v83, %v182
  %v184 = vpop.f32.mrb[0].mxu0
  %185 = vdwg.mxu0
  %v186 = vmax.f32 %v156, 0.0
  %v187 = vmax.f32 %v159, 0.0
  %v188 = vmax.f32 %v164, 0.0
  %v189 = vmax.f32 %v167, 0.0
  %v190 = vmax.f32 %v172, 0.0
  %v191 = vmax.f32 %v175, 0.0
  %v192 = vmax.f32 %v180, 0.0
  %v193 = vmax.f32 %v183, 0.0
  %v194 = vld [vmem:[%s3] sm:$0xf]
  %v195 = vld [vmem:[%s3 + $0x4] sm:$0xf]
  %v196 = vld [vmem:[%s3 + $0x8] sm:$0xf]
  %v197 = vld [vmem:[%s3 + $0xc] sm:$0xf]
  %v198 = vld [vmem:[%s3 + $0x10] sm:$0xf]
  %v199 = vld [vmem:[%s3 + $0x14] sm:$0xf]
  %v200 = vld [vmem:[%s3 + $0x18] sm:$0xf]
  %v201 = vld [vmem:[%s3 + $0x1c] sm:$0xf]
  %v202 = vpack.c.bf16 %v187, %v186
  %v203 = vpack.c.bf16 %v189, %v188
  %v204 = vpack.c.bf16 %v191, %v190
  %v205 = vpack.c.bf16 %v193, %v192
  %v206 = vld [vmem:[%s4] sm:$0xff]
  %v207 = vld [vmem:[%s4 + $0x8] sm:$0xff]
  %v208 = vld [vmem:[%s4 + $0x10] sm:$0xff]
  %v209 = vld [vmem:[%s4 + $0x18] sm:$0xff]
  %v210 = vld [vmem:[%s4 + $0x20] sm:$0xff]
  %v211 = vld [vmem:[%s4 + $0x28] sm:$0xff]
  %v212 = vld [vmem:[%s4 + $0x30] sm:$0xff]
  %v213 = vld [vmem:[%s4 + $0x38] sm:$0xff]
  %215 = vset.pattern.permute.xlu0 0
  %216 = vperm.xlu0 %215, %v206
  %v217 = vpop.permute.xlu0 %216
  %220 = vset.pattern.permute.xlu0 0
  %221 = vperm.xlu0 %220, %v207
  %v222 = vpop.permute.xlu0 %221
  %225 = vset.pattern.permute.xlu0 0
  %226 = vperm.xlu0 %225, %v208
  %v227 = vpop.permute.xlu0 %226
  %230 = vset.pattern.permute.xlu0 0
  %231 = vperm.xlu0 %230, %v209
  %v232 = vpop.permute.xlu0 %231
  %235 = vset.pattern.permute.xlu0 0
  %236 = vperm.xlu0 %235, %v210
  %v237 = vpop.permute.xlu0 %236
  %240 = vset.pattern.permute.xlu0 0
  %241 = vperm.xlu0 %240, %v211
  %v242 = vpop.permute.xlu0 %241
  %245 = vset.pattern.permute.xlu0 0
  %246 = vperm.xlu0 %245, %v212
  %v247 = vpop.permute.xlu0 %246
  %250 = vset.pattern.permute.xlu0 0
  %251 = vperm.xlu0 %250, %v213
  %v252 = vpop.permute.xlu0 %251
  %v262 = vunpack.c.l.b16 %v194
  %v263 = vunpack.c.l.b16 %v195
  %v264 = vunpack.c.l.b16 %v196
  %v265 = vunpack.c.l.b16 %v197
  %v266 = vunpack.c.l.b16 %v198
  %v267 = vunpack.c.l.b16 %v199
  %v268 = vunpack.c.l.b16 %v200
  %v269 = vunpack.c.l.b16 %v201
  %v270 = vpack.c.b16 %v263, %v262
  %v271 = vpack.c.b16 %v265, %v264
  %v272 = vpack.c.b16 %v267, %v266
  %v273 = vpack.c.b16 %v269, %v268
  %vm274 = vcmask 523264
  %v276 = vsel %vm274, %v270, 0
  %v279 = vsel %vm274, %v271, 0
  %v282 = vsel %vm274, %v272, 0
  %v285 = vsel %vm274, %v273, 0
  %287 = vmatprep.subr.bf16.mxu0 0
  %288 = vmatpush1.bf16.msra.mxu0 %v202
  %289 = vmatprep.subr.bf16.mxu0 0
  %290 = vmatpush1.bf16.msra.mxu0 %v203
  %291 = vmatprep.subr.bf16.mxu0 0
  %292 = vmatpush1.bf16.msra.mxu0 %v204
  %293 = vmatprep.subr.bf16.mxu0 0
  %294 = vmatpush1.bf16.msra.mxu0 %v205
  %295 = vmatprep.subr.bf16.mxu0 0
  %296 = vmatpush1.bf16.msra.mxu0 0
  %297 = vmatprep.subr.bf16.mxu0 0
  %298 = vmatpush1.bf16.msra.mxu0 0
  %299 = vmatprep.subr.bf16.mxu0 0
  %300 = vmatpush1.bf16.msra.mxu0 0
  %301 = vmatprep.subr.bf16.mxu0 0
  %302 = vmatpush1.bf16.msra.mxu0 0
  %303 = vmatprep.subr.bf16.mxu0 0
  %304 = vmatpush1.bf16.msra.mxu0 0
  %305 = vmatprep.subr.bf16.mxu0 0
  %306 = vmatpush1.bf16.msra.mxu0 0
  %307 = vmatprep.subr.bf16.mxu0 0
  %308 = vmatpush1.bf16.msra.mxu0 0
  %309 = vmatprep.subr.bf16.mxu0 0
  %310 = vmatpush1.bf16.msra.mxu0 0
  %311 = vmatprep.subr.bf16.mxu0 0
  %312 = vmatpush1.bf16.msra.mxu0 0
  %313 = vmatprep.subr.bf16.mxu0 0
  %314 = vmatpush1.bf16.msra.mxu0 0
  %315 = vmatprep.subr.bf16.mxu0 0
  %316 = vmatpush1.bf16.msra.mxu0 0
  %317 = vmatprep.subr.bf16.mxu0 0
  %318 = vmatpush1.bf16.msra.mxu0 0
  %319 = vmatprep.mubr.bf16.mxu0 0
  %320 = vmatmul.mubr.bf16.gmra.mrb[0].mxu0 %v276
  %v321 = vpop.f32.mrb[0].mxu0
  %v322 = vadd.f32 %v217, %v321
  %v323 = vpop.f32.mrb[0].mxu0
  %v324 = vpop.f32.mrb[0].mxu0
  %v325 = vadd.f32 %v222, %v324
  %v326 = vpop.f32.mrb[0].mxu0
  %327 = vmatprep.mubr.bf16.mxu0 0
  %328 = vmatmul.mubr.bf16.gmra.mrb[0].mxu0 %v279
  %v329 = vpop.f32.mrb[0].mxu0
  %v330 = vadd.f32 %v227, %v329
  %v331 = vpop.f32.mrb[0].mxu0
  %v332 = vpop.f32.mrb[0].mxu0
  %v333 = vadd.f32 %v232, %v332
  %v334 = vpop.f32.mrb[0].mxu0
  %335 = vmatprep.mubr.bf16.mxu0 0
  %336 = vmatmul.mubr.bf16.gmra.mrb[0].mxu0 %v282
  %v337 = vpop.f32.mrb[0].mxu0
  %v338 = vadd.f32 %v237, %v337
  %v339 = vpop.f32.mrb[0].mxu0
  %v340 = vpop.f32.mrb[0].mxu0
  %v341 = vadd.f32 %v242, %v340
  %v342 = vpop.f32.mrb[0].mxu0
  %343 = vmatprep.mubr.bf16.mxu0 0
  %344 = vmatmul.mubr.bf16.gmra.mrb[0].mxu0 %v285
  %v345 = vpop.f32.mrb[0].mxu0
  %v346 = vadd.f32 %v247, %v345
  %v347 = vpop.f32.mrb[0].mxu0
  %v348 = vpop.f32.mrb[0].mxu0
  %v349 = vadd.f32 %v252, %v348
  %v350 = vpop.f32.mrb[0].mxu0
  %351 = vdwg.mxu0
  %v352 = vmax.f32 %v322, 0.0
  %v353 = vmax.f32 %v325, 0.0
  %v354 = vmax.f32 %v330, 0.0
  %v355 = vmax.f32 %v333, 0.0
  %v356 = vmax.f32 %v338, 0.0
  %v357 = vmax.f32 %v341, 0.0
  %v358 = vmax.f32 %v346, 0.0
  %v359 = vmax.f32 %v349, 0.0
  %v360 = vld [vmem:[%s5] sm:$0x7]
  %v361 = vpack.c.bf16 %v353, %v352
  %v362 = vpack.c.bf16 %v355, %v354
  %v363 = vpack.c.bf16 %v357, %v356
  %v364 = vpack.c.bf16 %v359, %v358
  %v365 = vld [vmem:[%s6] sm:$0x3f]
  %367 = vset.pattern.permute.xlu0 0
  %368 = vperm.xlu0 %367, %v365
  %v369 = vpop.permute.xlu0 %368
  %v372 = vsel %vm274, %v360, 0
  %374 = vmatprep.subr.bf16.mxu0 0
  %375 = vmatpush1.bf16.msra.mxu0 %v361
  %376 = vmatprep.subr.bf16.mxu0 0
  %377 = vmatpush1.bf16.msra.mxu0 %v362
  %378 = vmatprep.subr.bf16.mxu0 0
  %379 = vmatpush1.bf16.msra.mxu0 %v363
  %380 = vmatprep.subr.bf16.mxu0 0
  %381 = vmatpush1.bf16.msra.mxu0 %v364
  %382 = vmatprep.subr.bf16.mxu0 0
  %383 = vmatpush1.bf16.msra.mxu0 0
  %384 = vmatprep.subr.bf16.mxu0 0
  %385 = vmatpush1.bf16.msra.mxu0 0
  %386 = vmatprep.subr.bf16.mxu0 0
  %387 = vmatpush1.bf16.msra.mxu0 0
  %388 = vmatprep.subr.bf16.mxu0 0
  %389 = vmatpush1.bf16.msra.mxu0 0
  %390 = vmatprep.subr.bf16.mxu0 0
  %391 = vmatpush1.bf16.msra.mxu0 0
  %392 = vmatprep.subr.bf16.mxu0 0
  %393 = vmatpush1.bf16.msra.mxu0 0
  %394 = vmatprep.subr.bf16.mxu0 0
  %395 = vmatpush1.bf16.msra.mxu0 0
  %396 = vmatprep.subr.bf16.mxu0 0
  %397 = vmatpush1.bf16.msra.mxu0 0
  %398 = vmatprep.subr.bf16.mxu0 0
  %399 = vmatpush1.bf16.msra.mxu0 0
  %400 = vmatprep.subr.bf16.mxu0 0
  %401 = vmatpush1.bf16.msra.mxu0 0
  %402 = vmatprep.subr.bf16.mxu0 0
  %403 = vmatpush1.bf16.msra.mxu0 0
  %404 = vmatprep.subr.bf16.mxu0 0
  %405 = vmatpush1.bf16.msra.mxu0 0
  %406 = vmatprep.mubr.bf16.mxu0 0
  %407 = vmatmul.mubr.bf16.gmra.mrb[0].mxu0 %v372
  %v408 = vpop.f32.mrb[0].mxu0
  %v409 = vadd.f32 %v369, %v408
  %v410 = vpop.f32.mrb[0].mxu0
  %v411 = vpop.f32.mrb[0].mxu0
  %v412 = vpop.f32.mrb[0].mxu0
  %413 = vdwg.mxu0
  %vm414 = vcmask 13312
  %415 = vst.msk [vmem:[%s7] sm:$0x3f] %vm414, %v409
  // Predicated region
  $region30: #{tpu_custom_call.1} parent=0 // pred_check
    _
  $region31: #{tpu_custom_call.1} parent=0 // pred_check_branch
    %417 = sbr.rel (0) target = $region33
  $region32: #{tpu_custom_call.1} parent=0 // pred_region
    _
  $region33: #{tpu_custom_call.1} parent=0 // pred_fallthru
    _
  // Predicated region
  $region34: #{tpu_custom_call.1} parent=0 // pred_check
    _
  $region35: #{tpu_custom_call.1} parent=0 // pred_check_branch
    %419 = sbr.rel (0) target = $region37
  $region36: #{tpu_custom_call.1} parent=0 // pred_region
    _
  $region37: #{tpu_custom_call.1} parent=0 // pred_fallthru
    _

</llo_original>
